<compile_context>
chip_gen: v6e
topology: v6e:2x2x1
jax: 0.10.0
libtpu: 0.0.40
codegen_flags: <defaults>
</compile_context>

<pallas_src>
import functools

import jax
import jax.numpy as jnp
from jax.experimental import pallas as pl
from jax.experimental.pallas import tpu as pltpu


def _vmem_budget_bytes():
    """~75% of this generation's VMEM (v5e/v6e 128 MiB -> 96 MiB, v7x 64 MiB -> 48 MiB).

    Falls back to the conservative v7x budget when the query is unavailable.
    """
    cap = 64 * 1024 * 1024
    try:
        info = pltpu.get_tpu_info()
        cap = int(getattr(info, "vmem_capacity_bytes", cap))
    except Exception:
        pass
    return (cap * 3) // 4


# ----------------------------- linear (dense) ------------------------------

def linear_kernel(x_ref, w_ref, b_ref, o_ref):
    # x: (tm, Din), w: (Din, tn) [already transposed vs torch], b: (1, tn)
    acc = jnp.dot(x_ref[...], w_ref[...], preferred_element_type=jnp.float32)
    o_ref[...] = (acc + b_ref[...]).astype(o_ref.dtype)


def pallas_linear(x2d, w_t, b2d, *, out_dtype=None):
    """y = x2d @ w_t + b2d, tiled over rows and (when needed) output columns."""
    M, Din = x2d.shape
    Dout = w_t.shape[1]
    out_dtype = x2d.dtype if out_dtype is None else out_dtype
    in_b = jnp.dtype(x2d.dtype).itemsize
    w_b = jnp.dtype(w_t.dtype).itemsize
    out_b = jnp.dtype(out_dtype).itemsize
    budget = _vmem_budget_bytes()

    # Output-column tile: whole Dout while the (double-buffered) weight panel is
    # comfortably resident, else 512-wide panels (multiple of the 128-lane vreg).
    tn = Dout if 2 * Din * Dout * w_b <= budget // 2 else min(Dout, 512)

    # Row tile: largest 128-multiple whose double-buffered x/out slabs fit the rest.
    tm = M
    if M > 256:
        remaining = max(budget - 2 * Din * tn * w_b, budget // 4)
        tm = 256
        for cand in (2048, 1024, 512, 256):
            if cand <= M and 2 * cand * (Din * in_b + tn * out_b) <= remaining:
                tm = cand
                break

    grid = (pl.cdiv(M, tm), pl.cdiv(Dout, tn))
    return pl.pallas_call(
        linear_kernel,
        out_shape=jax.ShapeDtypeStruct((M, Dout), out_dtype),
        grid=grid,
        in_specs=[
            pl.BlockSpec((tm, Din), lambda i, j: (i, 0)),
            # NOTE: budget math above assumes this weight panel is double-buffered.
            pl.BlockSpec((Din, tn), lambda i, j: (0, j)),
            pl.BlockSpec((1, tn), lambda i, j: (0, j)),
        ],
        out_specs=pl.BlockSpec((tm, tn), lambda i, j: (i, j)),
        compiler_params=pltpu.CompilerParams(
            dimension_semantics=("parallel", "parallel"),
            vmem_limit_bytes=budget,
        ),
    )(x2d, w_t, b2d)


# --------------------- fused QKV projection (self-attn) ---------------------

def qkv_linear_kernel(x_ref, wq_ref, wk_ref, wv_ref, bq_ref, bk_ref, bv_ref,
                      q_ref, k_ref, v_ref):
    # X tile is read from HBM/VMEM once and reused for all three projections.
    x = x_ref[...]
    q_ref[...] = (jnp.dot(x, wq_ref[...], preferred_element_type=jnp.float32)
                  + bq_ref[...]).astype(q_ref.dtype)
    k_ref[...] = (jnp.dot(x, wk_ref[...], preferred_element_type=jnp.float32)
                  + bk_ref[...]).astype(k_ref.dtype)
    v_ref[...] = (jnp.dot(x, wv_ref[...], preferred_element_type=jnp.float32)
                  + bv_ref[...]).astype(v_ref.dtype)


def pallas_qkv_linear(x2d, wq, wk, wv, bq, bk, bv):
    """Fused self-attention projections: returns (q2d, k2d, v2d) as separate arrays."""
    M, Din = x2d.shape
    Dout = wq.shape[1]
    in_b = jnp.dtype(x2d.dtype).itemsize
    w_b = jnp.dtype(wq.dtype).itemsize
    budget = _vmem_budget_bytes()

    if 6 * Din * Dout * w_b > budget // 2:
        # Weights too large to keep all three resident -> separate tiled launches.
        return (pallas_linear(x2d, wq, bq),
                pallas_linear(x2d, wk, bk),
                pallas_linear(x2d, wv, bv))

    tm = M
    if M > 256:
        remaining = max(budget - 6 * Din * Dout * w_b, budget // 4)
        tm = 256
        for cand in (2048, 1024, 512, 256):
            if cand <= M and 2 * cand * (Din + 3 * Dout) * in_b <= remaining:
                tm = cand
                break

    out_sds = jax.ShapeDtypeStruct((M, Dout), x2d.dtype)
    return pl.pallas_call(
        qkv_linear_kernel,
        out_shape=(out_sds, out_sds, out_sds),
        grid=(pl.cdiv(M, tm),),
        in_specs=[
            pl.BlockSpec((tm, Din), lambda i: (i, 0)),
            pl.BlockSpec((Din, Dout), lambda i: (0, 0)),
            pl.BlockSpec((Din, Dout), lambda i: (0, 0)),
            pl.BlockSpec((Din, Dout), lambda i: (0, 0)),
            pl.BlockSpec((1, Dout), lambda i: (0, 0)),
            pl.BlockSpec((1, Dout), lambda i: (0, 0)),
            pl.BlockSpec((1, Dout), lambda i: (0, 0)),
        ],
        out_specs=(
            pl.BlockSpec((tm, Dout), lambda i: (i, 0)),
            pl.BlockSpec((tm, Dout), lambda i: (i, 0)),
            pl.BlockSpec((tm, Dout), lambda i: (i, 0)),
        ),
        compiler_params=pltpu.CompilerParams(
            dimension_semantics=("parallel",),
            vmem_limit_bytes=budget,
        ),
    )(x2d, wq, wk, wv, bq, bk, bv)


# --------------------------- flash-style attention --------------------------

def attn_kernel(q_ref, k_ref, v_ref, m_ref, o_ref, m_sc, l_sc, acc_sc,
                *, kv_len, block_k, num_heads, depth, mask_tail):
    ki = pl.program_id(2)

    @pl.when(ki == 0)
    def _init():
        m_sc[...] = jnp.full(m_sc.shape, -1e30, dtype=jnp.float32)
        l_sc[...] = jnp.zeros(l_sc.shape, dtype=jnp.float32)
        acc_sc[...] = jnp.zeros(acc_sc.shape, dtype=jnp.float32)

    q = q_ref[...]                            # (H, tq, depth); 1/sqrt(depth) folded into Wq
    k = k_ref[...]                            # (H, tk, depth)
    v = v_ref[...]                            # (H, tk, depth)

    # QK^T as a leading-batch contraction (no materialized k.T), f32 MXU accumulation.
    s = jnp.einsum("hqd,hkd->hqk", q, k, preferred_element_type=jnp.float32)

    # Additive mask, shared across heads (module semantics: logits += mask * -1e9).
    bias = m_ref[...].astype(jnp.float32) * (-1000000000.0)      # (tq, tk)
    s = s + bias[None, :, :]

    if mask_tail:
        # KV tiles past the true sequence length contain undefined data: replace the
        # scores outright (garbage/NaN-proof) and zero the tail V rows.
        tq, tk = q.shape[1], k.shape[1]
        col = jax.lax.broadcasted_iota(jnp.int32, (tq, tk), 1) + ki * block_k
        s = jnp.where((col < kv_len)[None, :, :], s, jnp.float32(-1e30))
        row = jax.lax.broadcasted_iota(jnp.int32, (tk, 1), 0) + ki * block_k
        v = jnp.where((row < kv_len)[None, :, :], v, jnp.zeros_like(v))

    # Online (flash) softmax update in f32.
    m_prev = m_sc[...]
    m_new = jnp.maximum(m_prev, jnp.max(s, axis=-1, keepdims=True))
    alpha = jnp.exp(m_prev - m_new)
    p = jnp.exp(s - m_new)
    l_sc[...] = alpha * l_sc[...] + jnp.sum(p, axis=-1, keepdims=True)
    acc_sc[...] = alpha * acc_sc[...] + jnp.einsum(
        "hqk,hkd->hqd", p.astype(v.dtype), v, preferred_element_type=jnp.float32)
    m_sc[...] = m_new

    @pl.when(ki == pl.num_programs(2) - 1)
    def _finalize():
        inv_l = pl.reciprocal(l_sc[...], approx=False)          # cold path; keep exact
        out = (acc_sc[...] * inv_l).astype(o_ref.dtype)          # (H, tq, depth)
        # Merge heads in VMEM: write each head's depth-slice of the (tq, D) output
        # block. The block's HBM writeback is a single lane-dense (tq, D) DMA and the
        # wrapper needs no transpose/reshape pass afterwards.
        for h in range(num_heads):
            o_ref[:, h * depth:(h + 1) * depth] = out[h]


def pallas_attention(q, k, v, mask, *, tq=None, tk=None):
    """q:(B,H,Sq,depth), k/v:(B,H,Skv,depth), mask:(B,1,Sq,Skv) -> (B,Sq,H*depth)."""
    B, H, Sq, depth = q.shape
    Skv = k.shape[2]
    D = H * depth
    budget = _vmem_budget_bytes()
    e_qkv = jnp.dtype(q.dtype).itemsize
    e_msk = jnp.dtype(mask.dtype).itemsize

    def step_bytes(t_q, t_k):
        return (2 * H * t_q * depth * e_qkv       # Q blocks (double-buffered)
                + 4 * H * t_k * depth * e_qkv     # K + V blocks
                + 2 * t_q * t_k * e_msk           # mask blocks
                + 2 * t_q * D * e_qkv             # output blocks
                + H * t_q * depth * 4             # f32 acc scratch
                + 2 * H * t_q * 128 * 4)          # m/l scratch (lane-padded)

    if tq is None or tk is None:
        t = 256                                    # fills the 256-wide MXU on v6e/v7x
        while t > 128 and step_bytes(min(t, Sq), min(t, Skv)) > budget // 2:
            t //= 2                                # v7x (64 MiB VMEM) / huge H*depth guard
        if tq is None:
            tq = min(t, Sq)
        if tk is None:
            tk = min(t, Skv)

    n_q = pl.cdiv(Sq, tq)
    n_kv = pl.cdiv(Skv, tk)

    kernel = functools.partial(
        attn_kernel,
        kv_len=Skv,
        block_k=tk,
        num_heads=H,
        depth=depth,
        mask_tail=(Skv % tk) != 0,
    )

    return pl.pallas_call(
        kernel,
        out_shape=jax.ShapeDtypeStruct((B, Sq, D), q.dtype),
        grid=(B, n_q, n_kv),
        in_specs=[
            pl.BlockSpec((None, H, tq, depth), lambda b, qi, ki: (b, 0, qi, 0)),
            pl.BlockSpec((None, H, tk, depth), lambda b, qi, ki: (b, 0, ki, 0)),
            pl.BlockSpec((None, H, tk, depth), lambda b, qi, ki: (b, 0, ki, 0)),
            pl.BlockSpec((None, None, tq, tk), lambda b, qi, ki: (b, 0, qi, ki)),
        ],
        out_specs=pl.BlockSpec((None, tq, D), lambda b, qi, ki: (b, qi, 0)),
        scratch_shapes=[
            pltpu.VMEM((H, tq, 1), jnp.float32),      # running max m
            pltpu.VMEM((H, tq, 1), jnp.float32),      # running denom l
            pltpu.VMEM((H, tq, depth), jnp.float32),  # output accumulator
        ],
        compiler_params=pltpu.CompilerParams(
            dimension_semantics=("parallel", "parallel", "arbitrary"),
            vmem_limit_bytes=budget,
        ),
    )(q, k, v, mask)


# ------------------------------ Module glue ---------------------------------

def create_padding_mask(x_tokens):
    mask = (x_tokens == 0).astype(jnp.float32)             # (B, S)
    return mask[:, None, None, :]                          # (B, 1, 1, S)


def create_look_ahead_mask(x_tokens):
    seq_len = x_tokens.shape[1]
    look_ahead = jnp.triu(jnp.ones((seq_len, seq_len), jnp.float32), k=1)
    padding = create_padding_mask(x_tokens)                # (B, 1, 1, S)
    look_ahead = look_ahead[None, None, :, :]              # (1, 1, S, S)
    return jnp.maximum(look_ahead, padding)                # (B, 1, S, S)


def init_mha_params(key, d_model):
    keys = jax.random.split(key, 8)

    def lin(kw, kb):
        w = 0.02 * jax.random.normal(kw, (d_model, d_model), jnp.float32)  # torch (out, in)
        b = 0.02 * jax.random.normal(kb, (d_model,), jnp.float32)
        return w, b

    return {
        "q": lin(keys[0], keys[1]),
        "k": lin(keys[2], keys[3]),
        "v": lin(keys[4], keys[5]),
        "o": lin(keys[6], keys[7]),
    }


def multi_head_attention(params, query, key, value, mask, num_heads,
                         *, compute_dtype=jnp.bfloat16):
    """query:(B,Sq,D), key/value:(B,Skv,D), mask broadcastable to (B,1,Sq,Skv).

    compute_dtype defaults to bf16 (MXU operands) with f32 accumulation / softmax,
    which is the recommended mode on v5e/v6e/v7x. Pass jnp.float32 for full-precision
    operands.
    """
    B, Sq, D = query.shape
    Skv = key.shape[1]
    assert D % num_heads == 0, "d_model must be divisible by num_heads"
    depth = D // num_heads
    scale = 1.0 / float(depth) ** 0.5

    def prep_w(w, s=1.0):       # torch stores (out, in); kernels want (in, out)
        return (jnp.asarray(w).T * s).astype(compute_dtype)

    def prep_b(b, s=1.0):
        return (jnp.asarray(b) * s).reshape(1, -1).astype(jnp.float32)

    wq, bq = params["q"]
    wk, bk = params["k"]
    wv, bv = params["v"]
    wo, bo = params["o"]

    # Fold 1/sqrt(depth) into the Q projection parameters (free: params, not activations).
    wq_t, bq_2 = prep_w(wq, scale), prep_b(bq, scale)
    wk_t, bk_2 = prep_w(wk), prep_b(bk)
    wv_t, bv_2 = prep_w(wv), prep_b(bv)
    wo_t, bo_2 = prep_w(wo), prep_b(bo)

    x_q = query.astype(compute_dtype).reshape(B * Sq, D)

    if (query is key) and (key is value):
        # Self-attention: fused projection — X read once, Q/K/V emitted as three outputs.
        q2d, k2d, v2d = pallas_qkv_linear(x_q, wq_t, wk_t, wv_t, bq_2, bk_2, bv_2)
    else:
        x_k = key.astype(compute_dtype).reshape(B * Skv, D)
        x_v = value.astype(compute_dtype).reshape(B * Skv, D)
        q2d = pallas_linear(x_q, wq_t, bq_2)
        k2d = pallas_linear(x_k, wk_t, bk_2)
        v2d = pallas_linear(x_v, wv_t, bv_2)

    # TODO(synk): fold these head-split transposes into the attention kernel by blocking
    # the (B, S, H, depth) view directly (saves 3 HBM round-trips of Q/K/V).
    def split_heads(t2d, seq):
        return t2d.reshape(B, seq, num_heads, depth).transpose(0, 2, 1, 3)

    q = split_heads(q2d, Sq)
    k = split_heads(k2d, Skv)
    v = split_heads(v2d, Skv)

    # Mask stays (B, 1, Sq, Skv) in bf16 (exact for 0/1 masks, half the DMA of f32);
    # the head broadcast happens in-register inside the kernel.
    mask_b = jnp.broadcast_to(mask, (B, 1, Sq, Skv)).astype(jnp.bfloat16)

    attn = pallas_attention(q, k, v, mask_b)               # (B, Sq, D): heads merged in-kernel
    out = pallas_linear(attn.reshape(B * Sq, D), wo_t, bo_2, out_dtype=query.dtype)
    return out.reshape(B, Sq, D)


# ----------------------------- reference (JAX) ------------------------------

def reference_mha(params, query, key, value, mask, num_heads):
    B, Sq, D = query.shape
    Skv = key.shape[1]
    depth = D // num_heads

    def dense(x, wb):
        w, b = wb
        return x @ w.T + b

    def split(x, seq):
        return x.reshape(B, seq, num_heads, depth).transpose(0, 2, 1, 3)

    q = split(dense(query, params["q"]), Sq)
    k = split(dense(key, params["k"]), Skv)
    v = split(dense(value, params["v"]), Skv)
    logits = jnp.einsum("bhqd,bhkd->bhqk", q, k) / jnp.sqrt(jnp.float32(depth))
    logits = logits + mask * (-1000000000.0)
    w_attn = jax.nn.softmax(logits, axis=-1)
    out = jnp.einsum("bhqk,bhkd->bhqd", w_attn, v)
    concat = out.transpose(0, 2, 1, 3).reshape(B, Sq, D)
    return dense(concat, params["o"])


if __name__ == "__main__":
    B, S, D, H = 2, 8, 32, 4
    root = jax.random.PRNGKey(0)
    k_tok, k_q, k_k, k_v, k_p = jax.random.split(root, 5)

    # token ids with some padding zeros -> look-ahead + padding mask
    tokens = jax.random.randint(k_tok, (B, S), 0, 10)
    tokens = tokens.at[:, -2:].set(0)

    query = jax.random.normal(k_q, (B, S, D), jnp.float32)
    key_in = jax.random.normal(k_k, (B, S, D), jnp.float32)
    value = jax.random.normal(k_v, (B, S, D), jnp.float32)
    mask = create_look_ahead_mask(tokens)                  # (B, 1, S, S)

    params = init_mha_params(k_p, D)
    ref = reference_mha(params, query, key_in, value, mask, H)

    # (1) default path: bf16 MXU operands / f32 accumulation, distinct q/k/v inputs.
    out = jax.block_until_ready(multi_head_attention(params, query, key_in, value, mask, H))
    assert out.shape == (B, S, D)
    assert jnp.allclose(out, ref, atol=5e-2, rtol=5e-2), "bf16 cross-attention mismatch"

    # (2) self-attention path (exercises the fused QKV projection kernel).
    ref_self = reference_mha(params, query, query, query, mask, H)
    out_self = jax.block_until_ready(
        multi_head_attention(params, query, query, query, mask, H))
    assert jnp.allclose(out_self, ref_self, atol=5e-2, rtol=5e-2), "fused-QKV path mismatch"

    # (3) f32 operands: tighter check of the kernel math.
    out_f32 = jax.block_until_ready(
        multi_head_attention(params, query, key_in, value, mask, H,
                             compute_dtype=jnp.float32))
    assert jnp.allclose(out_f32, ref, atol=2e-3, rtol=2e-3), "f32 path mismatch"

    print("KERNEL_OK")
</pallas_src>

<mosaic_0001>
module attributes {stable_mosaic.version = 11 : i64} {
  func.func @linear_kernel(%arg0: i32, %arg1: i32, %arg2: memref<16x32xbf16, #tpu.memory_space<vmem>>, %arg3: memref<32x32xbf16, #tpu.memory_space<vmem>>, %arg4: memref<1x32xf32, #tpu.memory_space<vmem>>, %arg5: memref<16x32xbf16, #tpu.memory_space<vmem>>) attributes {dimension_semantics = [#tpu.dimension_semantics<parallel>, #tpu.dimension_semantics<parallel>], iteration_bounds = array<i64: 1, 1>, scalar_prefetch = 0 : i64, scratch_operands = 0 : i64, tpu.core_type = #tpu.core_type<tc>, window_params = [{transform_indices = @transform_0, window_bounds = array<i64: 16, 32>}, {transform_indices = @transform_1, window_bounds = array<i64: 32, 32>}, {transform_indices = @transform_2, window_bounds = array<i64: 1, 32>}, {transform_indices = @transform_3, window_bounds = array<i64: 16, 32>}]} {
    %c0 = arith.constant 0 : index
    %c0_0 = arith.constant 0 : index
    %0 = vector.load %arg2[%c0, %c0_0] : memref<16x32xbf16, #tpu.memory_space<vmem>>, vector<16x32xbf16>
    %c0_1 = arith.constant 0 : index
    %c0_2 = arith.constant 0 : index
    %1 = vector.load %arg3[%c0_1, %c0_2] : memref<32x32xbf16, #tpu.memory_space<vmem>>, vector<32x32xbf16>
    %cst = arith.constant dense<0.000000e+00> : vector<16x32xf32>
    %2 = tpu.matmul %0, %1, %cst {dimension_numbers = #tpu.dot_dimension_numbers<[1], [0], [0], [1], [0, 0, 1, 1], [], []>} : vector<16x32xbf16>, vector<32x32xbf16>, vector<16x32xf32> -> vector<16x32xf32>
    %c0_3 = arith.constant 0 : index
    %c0_4 = arith.constant 0 : index
    %3 = vector.load %arg4[%c0_3, %c0_4] : memref<1x32xf32, #tpu.memory_space<vmem>>, vector<1x32xf32>
    %4 = vector.broadcast %3 : vector<1x32xf32> to vector<16x32xf32>
    %5 = arith.addf %2, %4 : vector<16x32xf32>
    %6 = arith.truncf %5 : vector<16x32xf32> to vector<16x32xbf16>
    %c0_5 = arith.constant 0 : index
    %c0_6 = arith.constant 0 : index
    %7 = vector.load %arg5[%c0_5, %c0_6] : memref<16x32xbf16, #tpu.memory_space<vmem>>, vector<16x32xbf16>
    tpu.vector_store %arg5[%c0_5, %c0_6], %6 {strides = array<i32>} : memref<16x32xbf16, #tpu.memory_space<vmem>>, vector<16x32xbf16>,
    return
  }
  func.func @transform_0(%arg0: i32, %arg1: i32) -> (i32, i32) {
    %c0_i32 = arith.constant 0 : i32
    %c0_i32_0 = arith.constant 0 : i32
    return %arg0, %c0_i32 : i32, i32
  }
  func.func @transform_1(%arg0: i32, %arg1: i32) -> (i32, i32) {
    %c0_i32 = arith.constant 0 : i32
    %c0_i32_0 = arith.constant 0 : i32
    return %c0_i32, %arg1 : i32, i32
  }
  func.func @transform_2(%arg0: i32, %arg1: i32) -> (i32, i32) {
    %c0_i32 = arith.constant 0 : i32
    %c0_i32_0 = arith.constant 0 : i32
    return %c0_i32, %arg1 : i32, i32
  }
  func.func @transform_3(%arg0: i32, %arg1: i32) -> (i32, i32) {
    %c0_i32 = arith.constant 0 : i32
    return %arg0, %arg1 : i32, i32
  }
}

</mosaic_0001>

<llo_original>
// kernel: tpu_custom_call.1
$region0: #{tpu_custom_call.1}
  #allocation0 [shape = 'u32[]', space=smem, size = 0x4, offset = 0x4, fixed_abs, tag = 'smem constant byte address 0x4 - core index']
  #allocation1 [shape = 'u32[144,128]{1,0:T(1,128)}', space=vmem, size = 0x12000, scoped, tag = 'internal scratch']
  %s0 = inlined_call_operand.hbm [shape: bf16[16,32], index: 0, kind: input, shape index: {}]
  %s1 = inlined_call_operand.hbm [shape: bf16[32,32], index: 1, kind: input, shape index: {}]
  %s2 = inlined_call_operand.vmem [shape: f32[1,32], index: 2, kind: input, shape index: {}]
  %s3 = inlined_call_operand.hbm [shape: bf16[16,32], index: 3, kind: output, shape index: {}]
  %s4 = sld [smem:[#allocation0]]
  $region30: #{tpu_custom_call.1} parent=0
    _
  %s6 = ssub.s32 1, %s4
  %s7 = scalar_select 0, %s6, %s4
  $region1: #{tpu_custom_call.1} parent=0
    #allocation2 [shape = 'u8[4096]{0}', space=vmem, size = 0x1000, scoped, tag = 'input window, operand 0, single buffered']
    #allocation3 [shape = 's32[1]{0}', space=sflag, size = 0x4, scoped, tag = 'scoped memory for tpu_custom_call.1']
    #allocation4 [shape = 's32[1]{0}', space=sflag, size = 0x4, scoped, tag = 'scoped memory for tpu_custom_call.1']
    #allocation5 [shape = 'u8[8192]{0}', space=vmem, size = 0x2000, scoped, tag = 'input window, operand 1, single buffered']
    #allocation6 [shape = 's32[1]{0}', space=sflag, size = 0x4, scoped, tag = 'scoped memory for tpu_custom_call.1']
    #allocation7 [shape = 'u8[4096]{0}', space=vmem, size = 0x1000, scoped, tag = 'output window, operand 0, single buffered']
    %8 = vsyncpa [#allocation3], 0
    %9 = vsyncpa [#allocation6], 0
    %10 = vsyncpa [#allocation4], 0
    // Predicated region
    $region2: #{tpu_custom_call.1} parent=1 // pred_check
      _
    $region3: #{tpu_custom_call.1} parent=1 // pred_check_branch
      %12 = sbr.rel (0) target = $region5
    $region4: #{tpu_custom_call.1} parent=1 // pred_region
      %s14 = ssub.s32 128, 128
      %15 = vsyncadd [#allocation3], %s14
      %s16 = sshll.u32 [#allocation2], 4
      %s17 = int_to_ptr.vmem [resolvable:$true] %s16
      %22 = dma.hbm_to_vmem [thread:$0]  %s0, 128, %s17, [#allocation3], 64, 64, 4
    $region5: #{tpu_custom_call.1} parent=1 // pred_fallthru
      _
    // Predicated region
    $region6: #{tpu_custom_call.1} parent=1 // pred_check
      _
    $region7: #{tpu_custom_call.1} parent=1 // pred_check_branch
      %24 = sbr.rel (0) target = $region9
    $region8: #{tpu_custom_call.1} parent=1 // pred_region
      %s26 = ssub.s32 256, 256
      %27 = vsyncadd [#allocation6], %s26
      %s28 = sshll.u32 [#allocation5], 4
      %s29 = int_to_ptr.vmem [resolvable:$true] %s28
      %34 = dma.hbm_to_vmem [thread:$0]  %s1, 256, %s29, [#allocation6], 64, 64, 4
    $region9: #{tpu_custom_call.1} parent=1 // pred_fallthru
      _
    // Predicated region
    $region10: #{tpu_custom_call.1} parent=1 // pred_check
      _
    $region11: #{tpu_custom_call.1} parent=1 // pred_check_branch
      %36 = sbr.rel (0) target = $region13
    $region12: #{tpu_custom_call.1} parent=1 // pred_region
      _
    $region13: #{tpu_custom_call.1} parent=1 // pred_fallthru
      _
    // Predicated region
    $region14: #{tpu_custom_call.1} parent=1 // pred_check
      _
    $region15: #{tpu_custom_call.1} parent=1 // pred_check_branch
      %38 = sbr.rel (0) target = $region17
    $region16: #{tpu_custom_call.1} parent=1 // pred_region
      %39 = dma.done [#allocation3], 128
    $region17: #{tpu_custom_call.1} parent=1 // pred_fallthru
      _
    // Predicated region
    $region18: #{tpu_custom_call.1} parent=1 // pred_check
      _
    $region19: #{tpu_custom_call.1} parent=1 // pred_check_branch
      %41 = sbr.rel (0) target = $region21
    $region20: #{tpu_custom_call.1} parent=1 // pred_region
      %42 = dma.done [#allocation6], 256
    $region21: #{tpu_custom_call.1} parent=1 // pred_fallthru
      _
    %v44 = vld [vmem:[#allocation2] sm:$0xf]
    %v45 = vld [vmem:[#allocation2 + $0x4] sm:$0xf]
    %v46 = vld [vmem:[#allocation5] sm:$0xf]
    %v47 = vld [vmem:[#allocation5 + $0x4] sm:$0xf]
    %v48 = vld [vmem:[#allocation5 + $0x8] sm:$0xf]
    %v49 = vld [vmem:[#allocation5 + $0xc] sm:$0xf]
    %v50 = vld [vmem:[%s2] sm:$0x1]
    %v52 = vlaneseq
    %v53 = vshrl.u32 %v52, 7
    %v54 = vsub.s32 0, %v53
    %v55 = vrot.slane %v50, %v54
    %v59 = vunpack.c.l.b16 %v44
    %v60 = vunpack.c.l.b16 %v45
    %v61 = vpack.c.b16 %v60, %v59
    %v66 = vunpack.c.l.b16 %v46
    %v67 = vunpack.c.l.b16 %v47
    %v68 = vunpack.c.l.b16 %v48
    %v69 = vunpack.c.l.b16 %v49
    %v70 = vpack.c.b16 %v67, %v66
    %v71 = vpack.c.b16 %v69, %v68
    %vm74 = vcmask 261120
    %v76 = vsel %vm74, %v61, 0
    %78 = vmatprep.subr.bf16.mxu0 0
    %79 = vmatpush1.bf16.msra.mxu0 0
    %80 = vmatprep.subr.bf16.mxu0 0
    %81 = vmatpush1.bf16.msra.mxu0 0
    %82 = vmatprep.subr.bf16.mxu0 0
    %83 = vmatpush1.bf16.msra.mxu0 0
    %84 = vmatprep.subr.bf16.mxu0 0
    %85 = vmatpush1.bf16.msra.mxu0 0
    %86 = vmatprep.subr.bf16.mxu0 0
    %87 = vmatpush1.bf16.msra.mxu0 0
    %88 = vmatprep.subr.bf16.mxu0 0
    %89 = vmatpush1.bf16.msra.mxu0 0
    %90 = vmatprep.subr.bf16.mxu0 0
    %91 = vmatpush1.bf16.msra.mxu0 %v71
    %92 = vmatprep.subr.bf16.mxu0 0
    %93 = vmatpush1.bf16.msra.mxu0 %v70
    %94 = vmatprep.subr.bf16.mxu0 0
    %95 = vmatpush2.bf16.msra.mxu0 0
    %96 = vmatprep.subr.bf16.mxu0 0
    %97 = vmatpush2.bf16.msra.mxu0 0
    %98 = vmatprep.subr.bf16.mxu0 0
    %99 = vmatpush2.bf16.msra.mxu0 0
    %100 = vmatprep.subr.bf16.mxu0 0
    %101 = vmatpush2.bf16.msra.mxu0 0
    %102 = vmatprep.subr.bf16.mxu0 0
    %103 = vmatpush2.bf16.msra.mxu0 0
    %104 = vmatprep.subr.bf16.mxu0 0
    %105 = vmatpush2.bf16.msra.mxu0 0
    %106 = vmatprep.subr.bf16.mxu0 0
    %107 = vmatpush2.bf16.msra.mxu0 0
    %108 = vmatprep.subr.bf16.mxu0 0
    %109 = vmatpush2.bf16.msra.mxu0 0
    %110 = vmatprep.mubr.bf16.mxu0 0
    %111 = vmatmul.mubr.bf16.gmra.mxu0 %v76
    %v112 = vpop.f32.mrf.mxu0
    %v113 = vadd.f32 %v55, %v112
    %v114 = vpop.f32.mrf.mxu0
    %v115 = vpop.f32.mrf.mxu0
    %v116 = vadd.f32 %v55, %v115
    %v117 = vpop.f32.mrf.mxu0
    %118 = vdwg.mxu0
    %v119 = vpack.c.bf16 %v116, %v113
    %v121 = vunpack.c.l.b16 %v119
    %v122 = vunpack.c.h.b16 %v119
    %v123 = vpack.c.b16 %v121, %v121
    %v124 = vpack.c.b16 %v122, %v122
    %vm127 = vcmask 257024
    %128 = vst.msk [vmem:[#allocation7] sm:$0xf] %vm127, %v123
    %129 = vst.msk [vmem:[#allocation7 + $0x4] sm:$0xf] %vm127, %v124
    // Predicated region
    $region22: #{tpu_custom_call.1} parent=1 // pred_check
      _
    $region23: #{tpu_custom_call.1} parent=1 // pred_check_branch
      %131 = sbr.rel (0) target = $region25
    $region24: #{tpu_custom_call.1} parent=1 // pred_region
      %s133 = ssub.s32 128, 128
      %134 = vsyncadd [#allocation4], %s133
      %s135 = sshll.u32 [#allocation7], 4
      %s136 = int_to_ptr.vmem [resolvable:$true] %s135
      %141 = dma.vmem_to_hbm [thread:$0]  %s136, 128, %s3, [#allocation4], 64, 64, 4
    $region25: #{tpu_custom_call.1} parent=1 // pred_fallthru
      _
    // Predicated region
    $region26: #{tpu_custom_call.1} parent=1 // pred_check
      _
    $region27: #{tpu_custom_call.1} parent=1 // pred_check_branch
      %143 = sbr.rel (0) target = $region29
    $region28: #{tpu_custom_call.1} parent=1 // pred_region
      %144 = dma.done [#allocation4], 128
    $region29: #{tpu_custom_call.1} parent=1 // pred_fallthru
      _
    %145 = vsyncpa [#allocation3], 1
    %146 = vsyncpa [#allocation6], 1
    %147 = vsyncpa [#allocation4], 1

</llo_original>
